<compile_context>
chip_gen: v6e
topology: v6e:2x2x1
jax: 0.10.0
libtpu: 0.0.40
codegen_flags: <defaults>
</compile_context>

<pallas_src>
import jax
import jax.numpy as jnp
from jax.experimental import pallas as pl
from jax.experimental.pallas import tpu as pltpu


def _localize_kernel(x_ref, wc_ref, bc_ref, we_ref, be_ref,
                     logits_ref, cls_ref, maxrun_ref):
    t = pl.program_id(1)

    x = x_ref[...]                               # (tT, tB, D) f32 tile
    w_row = wc_ref[...]                          # (1, D) classifier weight row

    # --- Linear(d_model, 1) on every token: VPU mul + XLU lane reduce ------
    logits_ref[...] = jnp.sum(x * w_row[None, :, :], axis=-1) + bc_ref[0]

    # --- running max over the sequence axis (== transpose(1,0).max(1)) -----
    tile_max = jnp.max(x, axis=0)                # (tB, D)

    @pl.when(t == 0)
    def _():
        maxrun_ref[...] = tile_max

    @pl.when(t != 0)
    def _():
        maxrun_ref[...] = jnp.maximum(maxrun_ref[...], tile_max)

    # --- Linear(d_model, 28) on the pooled features, once per batch block --
    @pl.when(t == pl.num_programs(1) - 1)
    def _():
        cls = jnp.dot(maxrun_ref[...], we_ref[...],
                      preferred_element_type=jnp.float32)   # (tB, 28) on MXU
        cls_ref[...] = cls + be_ref[...]                     # broadcast (1, 28)


def supv_localize_forward(fused_content, w_cls_row, b_cls, w_evt, b_evt,
                          *, tile_bytes=4 * 1024 * 1024):
    """fused_content: (T, B, D) f32.

    w_cls_row: (1, D)   classifier weight stored as a row (VPU path)
    b_cls:     (1,)     classifier bias (SMEM scalar)
    w_evt:     (D, 28)  event-classifier weight (x @ W layout)
    b_evt:     (1, 28)  event-classifier bias

    Returns (logits (T, B, 1), class_scores (B, 28)).
    """
    T, B, D = fused_content.shape
    n_cls = w_evt.shape[1]

    # --- choose a sequence tile: ~tile_bytes per x block, sublane-aligned ---
    tT = max(1, min(T, tile_bytes // (B * D * 4)))
    tT = max(8, (tT // 8) * 8)                    # multiple of 8 for (tT, B) out block
    T_pad = ((T + tT - 1) // tT) * tT
    if T_pad != T:
        # replicate the last timestep: max-pool is unaffected, padded logits
        # rows are sliced off below.
        fused_content = jnp.pad(
            fused_content, ((0, T_pad - T), (0, 0), (0, 0)), mode="edge")
    n_t = T_pad // tT

    # batch grid axis (single block at toy B; marked "parallel" for v7x)
    tB = B
    n_b = 1

    logits_tb, class_scores = pl.pallas_call(
        _localize_kernel,
        out_shape=(
            jax.ShapeDtypeStruct((T_pad, B), jnp.float32),   # lane-dense logits
            jax.ShapeDtypeStruct((B, n_cls), jnp.float32),
        ),
        grid=(n_b, n_t),
        in_specs=[
            pl.BlockSpec((tT, tB, D), lambda b, t: (t, b, 0)),       # x tile
            pl.BlockSpec((1, D),      lambda b, t: (0, 0)),          # w_cls_row
            pl.BlockSpec(memory_space=pltpu.SMEM),                   # b_cls (1,)
            pl.BlockSpec((D, n_cls),  lambda b, t: (0, 0)),          # w_evt
            pl.BlockSpec((1, n_cls),  lambda b, t: (0, 0)),          # b_evt
        ],
        out_specs=(
            pl.BlockSpec((tT, tB),    lambda b, t: (t, b)),          # logits
            pl.BlockSpec((tB, n_cls), lambda b, t: (b, 0)),          # class_scores (resident over t)
        ),
        scratch_shapes=[pltpu.VMEM((tB, D), jnp.float32)],           # running max
        compiler_params=pltpu.CompilerParams(
            dimension_semantics=("parallel", "arbitrary"),
            vmem_limit_bytes=32 * 1024 * 1024,
        ),
    )(fused_content, w_cls_row, b_cls, w_evt, b_evt)

    # restore PyTorch (T, B, 1) logits shape; drop sequence padding.
    return logits_tb[:T, :, None], class_scores


def init_params(key, d_model):
    """Deterministic init matching nn.Linear shapes (uniform +-1/sqrt(d_model))."""
    k1, k2, k3, k4 = jax.random.split(key, 4)
    bound = 1.0 / jnp.sqrt(d_model)
    w_cls_row = jax.random.uniform(k1, (1, d_model), jnp.float32, -bound, bound)
    b_cls = jax.random.uniform(k2, (1,), jnp.float32, -bound, bound)
    w_evt = jax.random.uniform(k3, (d_model, 28), jnp.float32, -bound, bound)
    b_evt = jax.random.uniform(k4, (1, 28), jnp.float32, -bound, bound)
    return w_cls_row, b_cls, w_evt, b_evt


def _reference(fused_content, w_cls_row, b_cls, w_evt, b_evt):
    ref_logits = fused_content @ w_cls_row.T + b_cls          # (T, B, 1)
    ref_cls = jnp.max(fused_content, axis=0) @ w_evt + b_evt[0]   # (B, 28)
    return ref_logits, ref_cls


if __name__ == "__main__":
    key = jax.random.PRNGKey(0)
    kx, kp, kx2 = jax.random.split(key, 3)

    # --- case 1: single sequence tile (T divides tile) ----------------------
    T, B, D = 8, 2, 32
    fused_content = jax.random.normal(kx, (T, B, D), jnp.float32)
    w_cls_row, b_cls, w_evt, b_evt = init_params(kp, D)

    logits, class_scores = supv_localize_forward(
        fused_content, w_cls_row, b_cls, w_evt, b_evt)
    jax.block_until_ready((logits, class_scores))

    ref_logits, ref_cls = _reference(fused_content, w_cls_row, b_cls, w_evt, b_evt)
    assert logits.shape == (T, B, 1) and class_scores.shape == (B, 28)
    assert jnp.allclose(logits, ref_logits, atol=1e-5)
    assert jnp.allclose(class_scores, ref_cls, atol=1e-5)

    # --- case 2: multi-tile grid + sequence padding (exercises running max) -
    T2 = 20
    fused_content2 = jax.random.normal(kx2, (T2, B, D), jnp.float32)
    logits2, class_scores2 = supv_localize_forward(
        fused_content2, w_cls_row, b_cls, w_evt, b_evt,
        tile_bytes=8 * B * D * 4)   # force tT=8 -> 3 grid steps with padding
    jax.block_until_ready((logits2, class_scores2))

    ref_logits2, ref_cls2 = _reference(fused_content2, w_cls_row, b_cls, w_evt, b_evt)
    assert logits2.shape == (T2, B, 1) and class_scores2.shape == (B, 28)
    assert jnp.allclose(logits2, ref_logits2, atol=1e-5)
    assert jnp.allclose(class_scores2, ref_cls2, atol=1e-5)

    print("KERNEL_OK")
</pallas_src>

<mosaic_0001>
module attributes {stable_mosaic.version = 11 : i64} {
  func.func @_localize_kernel(%arg0: i32, %arg1: i32, %arg2: memref<8x2x32xf32, #tpu.memory_space<vmem>>, %arg3: memref<1x32xf32, #tpu.memory_space<vmem>>, %arg4: memref<1xf32, #tpu.memory_space<smem>>, %arg5: memref<32x28xf32, #tpu.memory_space<vmem>>, %arg6: memref<1x28xf32, #tpu.memory_space<vmem>>, %arg7: memref<8x2xf32, #tpu.memory_space<vmem>>, %arg8: memref<2x28xf32, #tpu.memory_space<vmem>>, %arg9: memref<2x32xf32, #tpu.memory_space<vmem>>) attributes {dimension_semantics = [#tpu.dimension_semantics<parallel>, #tpu.dimension_semantics<arbitrary>], iteration_bounds = array<i64: 1, 1>, scalar_prefetch = 0 : i64, scratch_operands = 1 : i64, tpu.core_type = #tpu.core_type<tc>, window_params = [{transform_indices = @transform_0, window_bounds = array<i64: 8, 2, 32>}, {pipeline_mode = #tpu.pipeline_mode<synchronous>, transform_indices = @transform_1, window_bounds = array<i64: 1, 32>}, {transform_indices = @transform_2, window_bounds = array<i64: 1>}, {pipeline_mode = #tpu.pipeline_mode<synchronous>, transform_indices = @transform_3, window_bounds = array<i64: 32, 28>}, {pipeline_mode = #tpu.pipeline_mode<synchronous>, transform_indices = @transform_4, window_bounds = array<i64: 1, 28>}, {transform_indices = @transform_5, window_bounds = array<i64: 8, 2>}, {transform_indices = @transform_6, window_bounds = array<i64: 2, 28>}]} {
    %c0 = arith.constant 0 : index
    %c0_0 = arith.constant 0 : index
    %c0_1 = arith.constant 0 : index
    %0 = vector.load %arg2[%c0, %c0_0, %c0_1] : memref<8x2x32xf32, #tpu.memory_space<vmem>>, vector<8x2x32xf32>
    %c0_2 = arith.constant 0 : index
    %c0_3 = arith.constant 0 : index
    %1 = vector.load %arg3[%c0_2, %c0_3] : memref<1x32xf32, #tpu.memory_space<vmem>>, vector<1x32xf32>
    %2 = vector.shape_cast %1 : vector<1x32xf32> to vector<1x1x32xf32>
    %3 = vector.broadcast %2 : vector<1x1x32xf32> to vector<8x2x32xf32>
    %4 = arith.mulf %0, %3 : vector<8x2x32xf32>
    %cst = arith.constant dense<0.000000e+00> : vector<8x2xf32>
    %5 = vector.multi_reduction <add>, %4, %cst [2] : vector<8x2x32xf32> to vector<8x2xf32>
    %c0_4 = arith.constant 0 : index
    %6 = memref.load %arg4[%c0_4] : memref<1xf32, #tpu.memory_space<smem>>
    %7 = vector.broadcast %6 : f32 to vector<8x2xf32>
    %8 = arith.addf %5, %7 : vector<8x2xf32>
    %c0_5 = arith.constant 0 : index
    %c0_6 = arith.constant 0 : index
    %9 = vector.load %arg7[%c0_5, %c0_6] : memref<8x2xf32, #tpu.memory_space<vmem>>, vector<8x2xf32>
    tpu.vector_store %arg7[%c0_5, %c0_6], %8 {strides = array<i32>} : memref<8x2xf32, #tpu.memory_space<vmem>>, vector<8x2xf32>,
    %cst_7 = arith.constant dense<0xFF800000> : vector<2x32xf32>
    %10 = vector.multi_reduction <maximumf>, %0, %cst_7 [0] : vector<8x2x32xf32> to vector<2x32xf32>
    %c0_i32 = arith.constant 0 : i32
    %11 = arith.cmpi eq, %arg1, %c0_i32 : i32
    %12 = arith.extui %11 : i1 to i32
    %c0_i32_8 = arith.constant 0 : i32
    %13 = arith.cmpi ne, %12, %c0_i32_8 : i32
    scf.if %13 {
      %c0_13 = arith.constant 0 : index
      %c0_14 = arith.constant 0 : index
      %20 = vector.load %arg9[%c0_13, %c0_14] : memref<2x32xf32, #tpu.memory_space<vmem>>, vector<2x32xf32>
      tpu.vector_store %arg9[%c0_13, %c0_14], %10 {strides = array<i32>} : memref<2x32xf32, #tpu.memory_space<vmem>>, vector<2x32xf32>,
    } else {
    }
    %c0_i32_9 = arith.constant 0 : i32
    %14 = arith.cmpi ne, %arg1, %c0_i32_9 : i32
    %15 = arith.extui %14 : i1 to i32
    %c0_i32_10 = arith.constant 0 : i32
    %16 = arith.cmpi ne, %15, %c0_i32_10 : i32
    scf.if %16 {
      %c0_13 = arith.constant 0 : index
      %c0_14 = arith.constant 0 : index
      %20 = vector.load %arg9[%c0_13, %c0_14] : memref<2x32xf32, #tpu.memory_space<vmem>>, vector<2x32xf32>
      %21 = arith.maximumf %20, %10 : vector<2x32xf32>
      %c0_15 = arith.constant 0 : index
      %c0_16 = arith.constant 0 : index
      %22 = vector.load %arg9[%c0_15, %c0_16] : memref<2x32xf32, #tpu.memory_space<vmem>>, vector<2x32xf32>
      tpu.vector_store %arg9[%c0_15, %c0_16], %21 {strides = array<i32>} : memref<2x32xf32, #tpu.memory_space<vmem>>, vector<2x32xf32>,
    } else {
    }
    %c0_i32_11 = arith.constant 0 : i32
    %17 = arith.cmpi eq, %arg1, %c0_i32_11 : i32
    %18 = arith.extui %17 : i1 to i32
    %c0_i32_12 = arith.constant 0 : i32
    %19 = arith.cmpi ne, %18, %c0_i32_12 : i32
    scf.if %19 {
      %c0_13 = arith.constant 0 : index
      %c0_14 = arith.constant 0 : index
      %20 = vector.load %arg9[%c0_13, %c0_14] : memref<2x32xf32, #tpu.memory_space<vmem>>, vector<2x32xf32>
      %c0_15 = arith.constant 0 : index
      %c0_16 = arith.constant 0 : index
      %21 = vector.load %arg5[%c0_15, %c0_16] : memref<32x28xf32, #tpu.memory_space<vmem>>, vector<32x28xf32>
      %cst_17 = arith.constant dense<0.000000e+00> : vector<2x28xf32>
      %22 = tpu.matmul %20, %21, %cst_17 {dimension_numbers = #tpu.dot_dimension_numbers<[1], [0], [0], [1], [0, 0, 1, 1], [], []>} : vector<2x32xf32>, vector<32x28xf32>, vector<2x28xf32> -> vector<2x28xf32>
      %c0_18 = arith.constant 0 : index
      %c0_19 = arith.constant 0 : index
      %23 = vector.load %arg6[%c0_18, %c0_19] : memref<1x28xf32, #tpu.memory_space<vmem>>, vector<1x28xf32>
      %24 = vector.broadcast %23 : vector<1x28xf32> to vector<2x28xf32>
      %25 = arith.addf %22, %24 : vector<2x28xf32>
      %c0_20 = arith.constant 0 : index
      %c0_21 = arith.constant 0 : index
      %26 = vector.load %arg8[%c0_20, %c0_21] : memref<2x28xf32, #tpu.memory_space<vmem>>, vector<2x28xf32>
      tpu.vector_store %arg8[%c0_20, %c0_21], %25 {strides = array<i32>} : memref<2x28xf32, #tpu.memory_space<vmem>>, vector<2x28xf32>,
    } else {
    }
    return
  }
  func.func @transform_0(%arg0: i32, %arg1: i32) -> (i32, i32, i32) {
    %c0_i32 = arith.constant 0 : i32
    %c0_i32_0 = arith.constant 0 : i32
    return %arg1, %arg0, %c0_i32 : i32, i32, i32
  }
  func.func @transform_1(%arg0: i32, %arg1: i32) -> (i32, i32) {
    %c0_i32 = arith.constant 0 : i32
    %c0_i32_0 = arith.constant 0 : i32
    %c0_i32_1 = arith.constant 0 : i32
    return %c0_i32, %c0_i32_0 : i32, i32
  }
  func.func @transform_2(%arg0: i32, %arg1: i32) -> i32 {
    %c0_i32 = arith.constant 0 : i32
    %c0_i32_0 = arith.constant 0 : i32
    return %c0_i32 : i32
  }
  func.func @transform_3(%arg0: i32, %arg1: i32) -> (i32, i32) {
    %c0_i32 = arith.constant 0 : i32
    %c0_i32_0 = arith.constant 0 : i32
    %c0_i32_1 = arith.constant 0 : i32
    return %c0_i32, %c0_i32_0 : i32, i32
  }
  func.func @transform_4(%arg0: i32, %arg1: i32) -> (i32, i32) {
    %c0_i32 = arith.constant 0 : i32
    %c0_i32_0 = arith.constant 0 : i32
    %c0_i32_1 = arith.constant 0 : i32
    return %c0_i32, %c0_i32_0 : i32, i32
  }
  func.func @transform_5(%arg0: i32, %arg1: i32) -> (i32, i32) {
    %c0_i32 = arith.constant 0 : i32
    return %arg1, %arg0 : i32, i32
  }
  func.func @transform_6(%arg0: i32, %arg1: i32) -> (i32, i32) {
    %c0_i32 = arith.constant 0 : i32
    %c0_i32_0 = arith.constant 0 : i32
    return %arg0, %c0_i32 : i32, i32
  }
}

</mosaic_0001>

<llo_original>
// kernel: tpu_custom_call.1
$region0: #{tpu_custom_call.1}
  #allocation0 [shape = 'u32[]', space=smem, size = 0x4, offset = 0x4, fixed_abs, tag = 'smem constant byte address 0x4 - core index']
  #allocation1 [shape = 'u32[144,128]{1,0:T(1,128)}', space=vmem, size = 0x12000, scoped, tag = 'internal scratch']
  #allocation2 [shape = 'f32[2,32]{1,0:T(2,128)}', space=vmem, size = 0x400, scoped, tag = 'scratch operand']
  #allocation3 [shape = 'f32[1]{0:T(128)S(6)}', space=smem, size = 0x200, scoped, tag = 'scoped memory for tpu_custom_call.1']
  %s0 = inlined_call_operand.hbm [shape: f32[8,2,32], index: 0, kind: input, shape index: {}]
  %s1 = inlined_call_operand.vmem [shape: f32[1,32], index: 1, kind: input, shape index: {}]
  %s2 = inlined_call_operand.<no memory space> [shape: f32[1], index: 2, kind: input, shape index: {}]
  %s3 = inlined_call_operand.hbm [shape: f32[32,28], index: 3, kind: input, shape index: {}]
  %s4 = inlined_call_operand.vmem [shape: f32[1,28], index: 4, kind: input, shape index: {}]
  %s5 = inlined_call_operand.vmem [shape: f32[8,2], index: 5, kind: output, shape index: {0}]
  %s6 = inlined_call_operand.hbm [shape: f32[2,28], index: 6, kind: output, shape index: {1}]
  %7 = xla_tuple %s5, %s6
  %s8 = sld [smem:[#allocation0]]
  $region58: #{tpu_custom_call.1} parent=0
    _
  %s10 = ssub.s32 1, %s8
  %s11 = scalar_select 0, %s10, %s8
  %12 = sst [smem:[#allocation3]] %s2
  $region1: #{tpu_custom_call.1} parent=0
    #allocation4 [shape = 'u8[8192]{0}', space=vmem, size = 0x2000, scoped, tag = 'input window, operand 0, single buffered']
    #allocation5 [shape = 's32[1]{0}', space=sflag, size = 0x4, scoped, tag = 'scoped memory for tpu_custom_call.1']
    #allocation6 [shape = 's32[1]{0}', space=sflag, size = 0x4, scoped, tag = 'scoped memory for tpu_custom_call.1']
    #allocation7 [shape = 'u8[16384]{0}', space=vmem, size = 0x4000, scoped, tag = 'input window, operand 3, single buffered']
    #allocation8 [shape = 's32[1]{0}', space=sflag, size = 0x4, scoped, tag = 'scoped memory for tpu_custom_call.1']
    #allocation9 [shape = 'u8[1024]{0}', space=vmem, size = 0x400, scoped, tag = 'output window, operand 1, single buffered']
    %13 = vsyncpa [#allocation5], 0
    %14 = vsyncpa [#allocation8], 0
    %15 = vsyncpa [#allocation6], 0
    // Predicated region
    $region2: #{tpu_custom_call.1} parent=1 // pred_check
      _
    $region3: #{tpu_custom_call.1} parent=1 // pred_check_branch
      %17 = sbr.rel (0) target = $region5
    $region4: #{tpu_custom_call.1} parent=1 // pred_region
      %s19 = ssub.s32 256, 256
      %20 = vsyncadd [#allocation5], %s19
      %s21 = sshll.u32 [#allocation4], 4
      %s22 = int_to_ptr.vmem [resolvable:$true] %s21
      %27 = dma.hbm_to_vmem [thread:$0]  %s0, 256, %s22, [#allocation5], 32, 32, 2
    $region5: #{tpu_custom_call.1} parent=1 // pred_fallthru
      _
    // Predicated region
    $region6: #{tpu_custom_call.1} parent=1 // pred_check
      _
    $region7: #{tpu_custom_call.1} parent=1 // pred_check_branch
      %29 = sbr.rel (0) target = $region9
    $region8: #{tpu_custom_call.1} parent=1 // pred_region
      _
    $region9: #{tpu_custom_call.1} parent=1 // pred_fallthru
      _
    // Predicated region
    $region10: #{tpu_custom_call.1} parent=1 // pred_check
      _
    $region11: #{tpu_custom_call.1} parent=1 // pred_check_branch
      %31 = sbr.rel (0) target = $region13
    $region12: #{tpu_custom_call.1} parent=1 // pred_region
      _
    $region13: #{tpu_custom_call.1} parent=1 // pred_fallthru
      _
    // Predicated region
    $region14: #{tpu_custom_call.1} parent=1 // pred_check
      _
    $region15: #{tpu_custom_call.1} parent=1 // pred_check_branch
      %33 = sbr.rel (0) target = $region17
    $region16: #{tpu_custom_call.1} parent=1 // pred_region
      %s35 = ssub.s32 512, 512
      %36 = vsyncadd [#allocation8], %s35
      %s37 = sshll.u32 [#allocation7], 4
      %s38 = int_to_ptr.vmem [resolvable:$true] %s37
      %43 = dma.hbm_to_vmem [thread:$0]  %s3, 512, %s38, [#allocation8], 128, 128, 8
    $region17: #{tpu_custom_call.1} parent=1 // pred_fallthru
      _
    // Predicated region
    $region18: #{tpu_custom_call.1} parent=1 // pred_check
      _
    $region19: #{tpu_custom_call.1} parent=1 // pred_check_branch
      %45 = sbr.rel (0) target = $region21
    $region20: #{tpu_custom_call.1} parent=1 // pred_region
      _
    $region21: #{tpu_custom_call.1} parent=1 // pred_fallthru
      _
    // Predicated region
    $region22: #{tpu_custom_call.1} parent=1 // pred_check
      _
    $region23: #{tpu_custom_call.1} parent=1 // pred_check_branch
      %47 = sbr.rel (0) target = $region25
    $region24: #{tpu_custom_call.1} parent=1 // pred_region
      %48 = dma.done [#allocation5], 256
    $region25: #{tpu_custom_call.1} parent=1 // pred_fallthru
      _
    // Predicated region
    $region26: #{tpu_custom_call.1} parent=1 // pred_check
      _
    $region27: #{tpu_custom_call.1} parent=1 // pred_check_branch
      %50 = sbr.rel (0) target = $region29
    $region28: #{tpu_custom_call.1} parent=1 // pred_region
      %51 = dma.done [#allocation8], 512
    $region29: #{tpu_custom_call.1} parent=1 // pred_fallthru
      _
    %v52 = vld [vmem:[#allocation4] sm:$0x3]
    %v53 = vld [vmem:[#allocation4 + $0x2] sm:$0x3]
    %v54 = vld [vmem:[#allocation4 + $0x4] sm:$0x3]
    %v55 = vld [vmem:[#allocation4 + $0x6] sm:$0x3]
    %v56 = vld [vmem:[#allocation4 + $0x8] sm:$0x3]
    %v57 = vld [vmem:[#allocation4 + $0xa] sm:$0x3]
    %v58 = vld [vmem:[#allocation4 + $0xc] sm:$0x3]
    %v59 = vld [vmem:[#allocation4 + $0xe] sm:$0x3]
    %v60 = vld [vmem:[%s1] sm:$0x1]
    %v62 = vlaneseq
    %v63 = vshrl.u32 %v62, 7
    %v64 = vsub.s32 0, %v63
    %v65 = vrot.slane %v60, %v64
    %v67 = vmul.f32 %v52, %v65
    %v68 = vmul.f32 %v53, %v65
    %v69 = vmul.f32 %v54, %v65
    %v70 = vmul.f32 %v55, %v65
    %v71 = vmul.f32 %v56, %v65
    %v72 = vmul.f32 %v57, %v65
    %v73 = vmul.f32 %v58, %v65
    %v74 = vmul.f32 %v59, %v65
    %vm75 = vcmask 254976
    %v76 = vsel %vm75, %v67, 0.0
    %77 = vadd.xlane.f32.xlu0 %v76
    %v78 = vpop.xlane.xlu0 %77
    %v79 = vsel %vm75, %v68, 0.0
    %80 = vadd.xlane.f32.xlu0 %v79
    %v81 = vpop.xlane.xlu0 %80
    %v82 = vsel %vm75, %v69, 0.0
    %83 = vadd.xlane.f32.xlu0 %v82
    %v84 = vpop.xlane.xlu0 %83
    %v85 = vsel %vm75, %v70, 0.0
    %86 = vadd.xlane.f32.xlu0 %v85
    %v87 = vpop.xlane.xlu0 %86
    %v88 = vsel %vm75, %v71, 0.0
    %89 = vadd.xlane.f32.xlu0 %v88
    %v90 = vpop.xlane.xlu0 %89
    %v91 = vsel %vm75, %v72, 0.0
    %92 = vadd.xlane.f32.xlu0 %v91
    %v93 = vpop.xlane.xlu0 %92
    %v94 = vsel %vm75, %v73, 0.0
    %95 = vadd.xlane.f32.xlu0 %v94
    %v96 = vpop.xlane.xlu0 %95
    %v97 = vsel %vm75, %v74, 0.0
    %98 = vadd.xlane.f32.xlu0 %v97
    %v99 = vpop.xlane.xlu0 %98
    %s100 = sld [smem:[#allocation3]]
    %v101 = vstv %s100
    %v102 = vadd.f32 %v78, %v101
    %v103 = vadd.f32 %v81, %v101
    %v104 = vadd.f32 %v84, %v101
    %v105 = vadd.f32 %v87, %v101
    %v106 = vadd.f32 %v90, %v101
    %v107 = vadd.f32 %v93, %v101
    %v108 = vadd.f32 %v96, %v101
    %v109 = vadd.f32 %v99, %v101
    %v118 = vlaneseq
    %v119 = vand.u32 %v118, 127
    %v120 = vlaneseq
    %v121 = vshrl.u32 %v120, 7
    %v122 = vsub.s32 %v119, %v121
    %v123 = vrot.slane %v102, %v122
    %v124 = vlaneseq
    %v125 = vshrl.u32 %v124, 7
    %v126 = vsub.s32 %v119, %v125
    %v127 = vrot.slane %v103, %v126
    %v128 = vlaneseq
    %v129 = vshrl.u32 %v128, 7
    %v130 = vsub.s32 %v119, %v129
    %v131 = vrot.slane %v104, %v130
    %v132 = vlaneseq
    %v133 = vshrl.u32 %v132, 7
    %v134 = vsub.s32 %v119, %v133
    %v135 = vrot.slane %v105, %v134
    %v136 = vlaneseq
    %v137 = vshrl.u32 %v136, 7
    %v138 = vsub.s32 %v119, %v137
    %v139 = vrot.slane %v106, %v138
    %v140 = vlaneseq
    %v141 = vshrl.u32 %v140, 7
    %v142 = vsub.s32 %v119, %v141
    %v143 = vrot.slane %v107, %v142
    %v144 = vlaneseq
    %v145 = vshrl.u32 %v144, 7
    %v146 = vsub.s32 %v119, %v145
    %v147 = vrot.slane %v108, %v146
    %v148 = vlaneseq
    %v149 = vshrl.u32 %v148, 7
    %v150 = vsub.s32 %v119, %v149
    %v151 = vrot.slane %v109, %v150
    %vm152 = vcmask 1041409
    %v153 = vsel %vm152, %v127, %v123
    %vm154 = vcmask 1042434
    %v155 = vsel %vm154, %v131, %v153
    %vm156 = vcmask 1043459
    %v157 = vsel %vm156, %v135, %v155
    %vm158 = vcmask 1044484
    %v159 = vsel %vm158, %v139, %v157
    %vm160 = vcmask 1045509
    %v161 = vsel %vm160, %v143, %v159
    %vm162 = vcmask 1046534
    %v163 = vsel %vm162, %v147, %v161
    %vm164 = vcmask 1047559
    %v165 = vsel %vm164, %v151, %v163
    %vm167 = vcmask 15360
    %168 = vst.msk [vmem:[%s5] sm:$0xff] %vm167, %v165
    %v169 = vsel %vm75, %v52, -inf
    %v170 = vsel %vm75, %v53, -inf
    %v171 = vsel %vm75, %v54, -inf
    %v172 = vsel %vm75, %v55, -inf
    %v173 = vsel %vm75, %v56, -inf
    %v174 = vmax.f32 %v169, %v173
    %v175 = vsel %vm75, %v57, -inf
    %v176 = vmax.f32 %v170, %v175
    %v177 = vsel %vm75, %v58, -inf
    %v178 = vmax.f32 %v171, %v177
    %v179 = vsel %vm75, %v59, -inf
    %v180 = vmax.f32 %v172, %v179
    %v181 = vmax.f32 %v174, %v176
    %v182 = vmax.f32 %v178, %v180
    %v183 = vmax.f32 %v181, %v182
    %p184 = scmp.eq.s32.totalorder 0, 0
    // Predicated region
    $region30: #{tpu_custom_call.1} parent=1 // pred_check
      %p185 = pneg %p184
    $region31: #{tpu_custom_call.1} parent=1 // pred_check_branch
      %187 = sbr.rel (%p185) target = $region33
    $region32: #{tpu_custom_call.1} parent=1 // pred_region
      %188 = vst.msk [vmem:[#allocation2] sm:$0x3] %vm75, %v183
    $region33: #{tpu_custom_call.1} parent=1 // pred_fallthru
      _
    %p189 = scmp.ne.s32.totalorder 0, 0
    // Predicated region
    $region34: #{tpu_custom_call.1} parent=1 // pred_check
      %p190 = pneg %p189
    $region35: #{tpu_custom_call.1} parent=1 // pred_check_branch
      %192 = sbr.rel (%p190) target = $region37
    $region36: #{tpu_custom_call.1} parent=1 // pred_region
      %v193 = vld [vmem:[#allocation2] sm:$0x3]
      %v194 = vmax.f32 %v193, %v183
      %195 = vst.msk [vmem:[#allocation2] sm:$0x3] %vm75, %v194
    $region37: #{tpu_custom_call.1} parent=1 // pred_fallthru
      _
    // Predicated region
    $region38: #{tpu_custom_call.1} parent=1 // pred_check
      %p196 = pneg %p184
    $region39: #{tpu_custom_call.1} parent=1 // pred_check_branch
      %198 = sbr.rel (%p196) target = $region41
    $region40: #{tpu_custom_call.1} parent=1 // pred_region
      %v199 = vld [vmem:[#allocation2] sm:$0x3]
      %v200 = vld [vmem:[#allocation7] sm:$0xff]
      %v201 = vld [vmem:[#allocation7 + $0x8] sm:$0xff]
      %v202 = vld [vmem:[#allocation7 + $0x10] sm:$0xff]
      %v203 = vld [vmem:[#allocation7 + $0x18] sm:$0xff]
      %v204 = vld [vmem:[%s4] sm:$0x1]
      %v206 = vlaneseq
      %v207 = vshrl.u32 %v206, 7
      %v208 = vsub.s32 0, %v207
      %v209 = vrot.slane %v204, %v208
      %vm211 = vcmask 261120
      %v213 = vsel %vm211, %v199, 0
      %215 = vmatprep.subr.mxu0 0.0
      %216 = vmatpush1.msra.mxu0 0.0
      %217 = vmatprep.subr.mxu0 0.0
      %218 = vmatpush1.msra.mxu0 0.0
      %219 = vmatprep.subr.mxu0 0.0
      %220 = vmatpush1.msra.mxu0 0.0
      %221 = vmatprep.subr.mxu0 0.0
      %222 = vmatpush1.msra.mxu0 0.0
      %223 = vmatprep.subr.mxu0 0.0
      %224 = vmatpush1.msra.mxu0 0.0
      %225 = vmatprep.subr.mxu0 0.0
      %226 = vmatpush1.msra.mxu0 0.0
      %227 = vmatprep.subr.mxu0 0.0
      %228 = vmatpush1.msra.mxu0 0.0
      %229 = vmatprep.subr.mxu0 0.0
      %230 = vmatpush1.msra.mxu0 0.0
      %231 = vmatprep.subr.mxu0 0.0
      %232 = vmatpush1.msra.mxu0 0.0
      %233 = vmatprep.subr.mxu0 0.0
      %234 = vmatpush1.msra.mxu0 0.0
      %235 = vmatprep.subr.mxu0 0.0
      %236 = vmatpush1.msra.mxu0 0.0
      %237 = vmatprep.subr.mxu0 0.0
      %238 = vmatpush1.msra.mxu0 0.0
      %239 = vmatprep.subr.mxu0 0.0
      %240 = vmatpush1.msra.mxu0 %v203
      %241 = vmatprep.subr.mxu0 0.0
      %242 = vmatpush1.msra.mxu0 %v202
      %243 = vmatprep.subr.mxu0 0.0
      %244 = vmatpush1.msra.mxu0 %v201
      %245 = vmatprep.subr.mxu0 0.0
      %246 = vmatpush1.msra.mxu0 %v200
      %247 = vmatprep.subr.mxu0 0.0
      %248 = vmatpush2.msra.mxu0 0.0
      %249 = vmatprep.subr.mxu0 0.0
      %250 = vmatpush2.msra.mxu0 0.0
      %251 = vmatprep.subr.mxu0 0.0
      %252 = vmatpush2.msra.mxu0 0.0
      %253 = vmatprep.subr.mxu0 0.0
      %254 = vmatpush2.msra.mxu0 0.0
      %255 = vmatprep.subr.mxu0 0.0
      %256 = vmatpush2.msra.mxu0 0.0
      %257 = vmatprep.subr.mxu0 0.0
      %258 = vmatpush2.msra.mxu0 0.0
      %259 = vmatprep.subr.mxu0 0.0
      %260 = vmatpush2.msra.mxu0 0.0
      %261 = vmatprep.subr.mxu0 0.0
      %262 = vmatpush2.msra.mxu0 0.0
      %263 = vmatprep.subr.mxu0 0.0
      %264 = vmatpush2.msra.mxu0 0.0
      %265 = vmatprep.subr.mxu0 0.0
      %266 = vmatpush2.msra.mxu0 0.0
      %267 = vmatprep.subr.mxu0 0.0
      %268 = vmatpush2.msra.mxu0 0.0
      %269 = vmatprep.subr.mxu0 0.0
      %270 = vmatpush2.msra.mxu0 0.0
      %271 = vmatprep.subr.mxu0 0.0
      %272 = vmatpush2.msra.mxu0 0.0
      %273 = vmatprep.subr.mxu0 0.0
      %274 = vmatpush2.msra.mxu0 0.0
      %275 = vmatprep.subr.mxu0 0.0
      %276 = vmatpush2.msra.mxu0 0.0
      %277 = vmatprep.subr.mxu0 0.0
      %278 = vmatpush2.msra.mxu0 0.0
      %279 = vmatprep.mubr.f32.mxu0 0.0
      %280 = vmatmul.mubr.f32.gmra.mxu0 %v213
      %v281 = vpop.f32.mrf.mxu0
      %v282 = vadd.f32 %v209, %v281
      %v283 = vpop.f32.mrf.mxu0
      %284 = vdwg.mxu0
      %vm285 = vcmask 222208
      %286 = vst.msk [vmem:[#allocation9] sm:$0x3] %vm285, %v282
    $region41: #{tpu_custom_call.1} parent=1 // pred_fallthru
      _
    // Predicated region
    $region42: #{tpu_custom_call.1} parent=1 // pred_check
      _
    $region43: #{tpu_custom_call.1} parent=1 // pred_check_branch
      %288 = sbr.rel (0) target = $region45
    $region44: #{tpu_custom_call.1} parent=1 // pred_region
      _
    $region45: #{tpu_custom_call.1} parent=1 // pred_fallthru
      _
    // Predicated region
    $region46: #{tpu_custom_call.1} parent=1 // pred_check
      _
    $region47: #{tpu_custom_call.1} parent=1 // pred_check_branch
      %290 = sbr.rel (0) target = $region49
    $region48: #{tpu_custom_call.1} parent=1 // pred_region
      %s292 = ssub.s32 32, 32
      %293 = vsyncadd [#allocation6], %s292
      %s295 = sshll.u32 [#allocation9], 4
      %s296 = int_to_ptr.vmem [resolvable:$true] %s295
      %298 = dma.vmem_to_hbm [thread:$0]  %s296, 32, %s6, [#allocation6]
    $region49: #{tpu_custom_call.1} parent=1 // pred_fallthru
      _
    // Predicated region
    $region50: #{tpu_custom_call.1} parent=1 // pred_check
      _
    $region51: #{tpu_custom_call.1} parent=1 // pred_check_branch
      %300 = sbr.rel (0) target = $region53
    $region52: #{tpu_custom_call.1} parent=1 // pred_region
      _
    $region53: #{tpu_custom_call.1} parent=1 // pred_fallthru
      _
    // Predicated region
    $region54: #{tpu_custom_call.1} parent=1 // pred_check
      _
    $region55: #{tpu_custom_call.1} parent=1 // pred_check_branch
      %302 = sbr.rel (0) target = $region57
    $region56: #{tpu_custom_call.1} parent=1 // pred_region
      %303 = dma.done [#allocation6], 32
    $region57: #{tpu_custom_call.1} parent=1 // pred_fallthru
      _
    %304 = vsyncpa [#allocation5], 1
    %305 = vsyncpa [#allocation8], 1
    %306 = vsyncpa [#allocation6], 1

</llo_original>
